<compile_context>
chip_gen: v7x
topology: tpu7x:2x2x1
jax: 0.10.0
libtpu: 0.0.40
codegen_flags: <defaults>
</compile_context>

<pallas_src>
import math

import jax
import jax.numpy as jnp
from jax.experimental import pallas as pl
from jax.experimental.pallas import tpu as pltpu

LANE = 128  # vreg lane width; also the hidden size this kernel assumes.


def _softplus(x):
    # Numerically-stable softplus, matches F.softplus to ~1e-7.
    return jnp.maximum(x, 0.0) + jnp.log1p(jnp.exp(-jnp.abs(x)))


def _make_kernel(d_in_p, h, r_w2, r_w3, r_wo, r_b):
    """Kernel over a packed parameter slab.

    Slab layout (rows, all offsets multiples of 8; 128 lanes wide):
      [0        : d_in_p)      w1_t  (d_in_p, H)   (zero-padded rows beyond D_in)
      [r_w2     : r_w2 + H)    w2_t  (H, H)
      [r_w3     : r_w3 + H)    w3_t  (H, H)
      [r_wo     : r_wo + H)    wo_t  (H, 128)      (zero-padded cols beyond D_out)
      [r_b      : r_b + 8)     biases: row0=b1, row1=b2, row2=b3, row3=bo(padded), rest 0
    """

    def kernel(x_ref, p_ref, o_ref):
        x = x_ref[...]
        w1 = p_ref[0:d_in_p, :]
        w2 = p_ref[r_w2:r_w2 + h, :]
        w3 = p_ref[r_w3:r_w3 + h, :]
        wo = p_ref[r_wo:r_wo + h, :]
        bias = p_ref[r_b:r_b + 8, :]
        b1 = bias[0:1, :]
        b2 = bias[1:2, :]
        b3 = bias[2:3, :]
        bo = bias[3:4, :]

        hdn = _softplus(jnp.dot(x, w1, preferred_element_type=jnp.float32) + b1)
        hdn = _softplus(jnp.dot(hdn, w2, preferred_element_type=jnp.float32) + b2)
        hdn = _softplus(jnp.dot(hdn, w3, preferred_element_type=jnp.float32) + b3)
        act = jnp.tanh(jnp.dot(hdn, wo, preferred_element_type=jnp.float32) + bo)
        o_ref[...] = act.astype(o_ref.dtype)

    return kernel


def actor_forward(x, params, *, batch_blocks=None):
    """x: (B, input_size). params: ((w1,b1),(w2,b2),(w3,b3),(wo,bo)) in PyTorch
    (out, in) weight layout. Returns (B, output_size) actions.

    batch_blocks=None auto-selects: 2 (one block per v7x TensorCore) only when the
    per-core batch is >= 128 rows; otherwise the grid-free single-block path."""
    B, D_in = x.shape
    (w1, b1), (w2, b2), (w3, b3), (wo, bo) = params
    H = w1.shape[0]
    D_out = wo.shape[0]
    assert H == LANE, "kernel assumes hidden_size == 128"
    assert D_out <= LANE

    f32 = jnp.float32
    # Pad the input feature dim to a sublane multiple (zero rows of w1_t contribute 0).
    d_in_p = ((D_in + 7) // 8) * 8

    # ---- Pack all weights/biases into one (8,128)-aligned slab (one DMA). ----
    w1_t = jnp.zeros((d_in_p, H), f32).at[:D_in, :].set(w1.T.astype(f32))
    w2_t = w2.T.astype(f32)
    w3_t = w3.T.astype(f32)
    wo_t = jnp.zeros((H, LANE), f32).at[:, :D_out].set(wo.T.astype(f32))

    bias_blk = jnp.zeros((8, LANE), f32)
    bias_blk = bias_blk.at[0, :H].set(b1.astype(f32))
    bias_blk = bias_blk.at[1, :H].set(b2.astype(f32))
    bias_blk = bias_blk.at[2, :H].set(b3.astype(f32))
    bias_blk = bias_blk.at[3, :D_out].set(bo.astype(f32))

    slab = jnp.concatenate([w1_t, w2_t, w3_t, wo_t, bias_blk], axis=0)

    r_w2 = d_in_p
    r_w3 = d_in_p + H
    r_wo = d_in_p + 2 * H
    r_b = d_in_p + 3 * H

    if d_in_p != D_in:
        x_p = jnp.zeros((B, d_in_p), x.dtype).at[:, :D_in].set(x)
    else:
        x_p = x

    if batch_blocks is None:
        # Megacore split only when each core gets a real amount of work.
        batch_blocks = 2 if (B % 2 == 0 and (B // 2) >= 128) else 1

    kernel = _make_kernel(d_in_p, H, r_w2, r_w3, r_wo, r_b)
    out_shape = jax.ShapeDtypeStruct((B, LANE), x.dtype)

    if batch_blocks == 1:
        # Grid-free path: whole arrays resident in VMEM, no pipeline bookkeeping.
        out = pl.pallas_call(
            kernel,
            out_shape=out_shape,
            in_specs=[
                pl.BlockSpec(memory_space=pltpu.MemorySpace.VMEM),  # x
                pl.BlockSpec(memory_space=pltpu.MemorySpace.VMEM),  # packed params
            ],
            out_specs=pl.BlockSpec(memory_space=pltpu.MemorySpace.VMEM),
        )(x_p, slab)
    else:
        assert B % batch_blocks == 0, "batch must divide evenly across blocks"
        bm = B // batch_blocks
        assert bm % 8 == 0, "per-block batch must be sublane-aligned"
        out = pl.pallas_call(
            kernel,
            out_shape=out_shape,
            grid_spec=pltpu.PrefetchScalarGridSpec(
                num_scalar_prefetch=0,
                grid=(batch_blocks,),
                in_specs=[
                    pl.BlockSpec((bm, d_in_p), lambda i: (i, 0)),   # x (batch-tiled)
                    pl.BlockSpec(slab.shape, lambda i: (0, 0)),     # params (replicated)
                ],
                out_specs=pl.BlockSpec((bm, LANE), lambda i: (i, 0)),
            ),
            compiler_params=pltpu.CompilerParams(
                dimension_semantics=("parallel",)),
        )(x_p, slab)

    # Padded output columns are exactly tanh(0 + 0) == 0; slice them off here.
    return out[:, :D_out]


def actor_forward_ref(x, params):
    """Pure-JAX reference matching the PyTorch Actor.forward."""
    (w1, b1), (w2, b2), (w3, b3), (wo, bo) = params
    h = jax.nn.softplus(x @ w1.T + b1)
    h = jax.nn.softplus(h @ w2.T + b2)
    h = jax.nn.softplus(h @ w3.T + b3)
    return jnp.tanh(h @ wo.T + bo)


def _init_linear(key, in_f, out_f):
    # Mimic torch.nn.Linear default init: U(-1/sqrt(in), 1/sqrt(in))
    kw, kb = jax.random.split(key)
    bound = 1.0 / math.sqrt(in_f)
    w = jax.random.uniform(kw, (out_f, in_f), jnp.float32, -bound, bound)
    b = jax.random.uniform(kb, (out_f,), jnp.float32, -bound, bound)
    return w, b


if __name__ == "__main__":
    D_in, H, D_out = 32, 128, 4   # input_size, hidden_size, output_size

    key = jax.random.PRNGKey(0)
    kx, kx2, k1, k2, k3, k4 = jax.random.split(key, 6)

    params = (
        _init_linear(k1, D_in, H),   # fc1
        _init_linear(k2, H, H),      # fc2
        _init_linear(k3, H, H),      # fc3
        _init_linear(k4, H, D_out),  # action_out
    )

    # Small batch: auto-selects the grid-free single-block path (best on v5e/v6e/v7x).
    x_small = jax.random.normal(kx, (16, D_in), jnp.float32)
    ref_small = actor_forward_ref(x_small, params)
    out_small = jax.block_until_ready(actor_forward(x_small, params))
    assert out_small.shape == (16, D_out)
    assert jnp.allclose(out_small, ref_small, atol=2e-5, rtol=2e-5), "mismatch (B=16)"

    # Large batch: auto-selects the megacore (batch_blocks=2) grid path.
    x_large = jax.random.normal(kx2, (256, D_in), jnp.float32)
    ref_large = actor_forward_ref(x_large, params)
    out_large = jax.block_until_ready(actor_forward(x_large, params))
    assert out_large.shape == (256, D_out)
    assert jnp.allclose(out_large, ref_large, atol=2e-5, rtol=2e-5), "mismatch (B=256)"

    print("KERNEL_OK")
</pallas_src>

<mosaic_0001>
module attributes {stable_mosaic.version = 11 : i64} {
  func.func @kernel(%arg0: memref<16x32xf32, #tpu.memory_space<vmem>>, %arg1: memref<424x128xf32, #tpu.memory_space<vmem>>, %arg2: memref<16x128xf32, #tpu.memory_space<vmem>>) attributes {dimension_semantics = [], scalar_prefetch = 0 : i64, scratch_operands = 0 : i64, tpu.core_type = #tpu.core_type<tc>} {
    %c0 = arith.constant 0 : index
    %c0_0 = arith.constant 0 : index
    %0 = vector.load %arg0[%c0, %c0_0] : memref<16x32xf32, #tpu.memory_space<vmem>>, vector<16x32xf32>
    %c0_1 = arith.constant 0 : index
    %c0_2 = arith.constant 0 : index
    %1 = vector.load %arg1[%c0_1, %c0_2] : memref<424x128xf32, #tpu.memory_space<vmem>>, vector<32x128xf32>
    %c32 = arith.constant 32 : index
    %c0_3 = arith.constant 0 : index
    %2 = vector.load %arg1[%c32, %c0_3] : memref<424x128xf32, #tpu.memory_space<vmem>>, vector<128x128xf32>
    %c160 = arith.constant 160 : index
    %c0_4 = arith.constant 0 : index
    %3 = vector.load %arg1[%c160, %c0_4] : memref<424x128xf32, #tpu.memory_space<vmem>>, vector<128x128xf32>
    %c288 = arith.constant 288 : index
    %c0_5 = arith.constant 0 : index
    %4 = vector.load %arg1[%c288, %c0_5] : memref<424x128xf32, #tpu.memory_space<vmem>>, vector<128x128xf32>
    %c416 = arith.constant 416 : index
    %c0_6 = arith.constant 0 : index
    %5 = vector.load %arg1[%c416, %c0_6] : memref<424x128xf32, #tpu.memory_space<vmem>>, vector<8x128xf32>
    %6 = vector.extract_strided_slice %5 {offsets = [0, 0], sizes = [1, 128], strides = [1, 1]} : vector<8x128xf32> to vector<1x128xf32>
    %7 = vector.extract_strided_slice %5 {offsets = [1, 0], sizes = [1, 128], strides = [1, 1]} : vector<8x128xf32> to vector<1x128xf32>
    %8 = vector.extract_strided_slice %5 {offsets = [2, 0], sizes = [1, 128], strides = [1, 1]} : vector<8x128xf32> to vector<1x128xf32>
    %9 = vector.extract_strided_slice %5 {offsets = [3, 0], sizes = [1, 128], strides = [1, 1]} : vector<8x128xf32> to vector<1x128xf32>
    %cst = arith.constant dense<0.000000e+00> : vector<16x128xf32>
    %10 = tpu.matmul %0, %1, %cst {dimension_numbers = #tpu.dot_dimension_numbers<[1], [0], [0], [1], [0, 0, 1, 1], [], []>} : vector<16x32xf32>, vector<32x128xf32>, vector<16x128xf32> -> vector<16x128xf32>
    %11 = vector.broadcast %6 : vector<1x128xf32> to vector<16x128xf32>
    %12 = arith.addf %10, %11 : vector<16x128xf32>
    %cst_7 = arith.constant 0.000000e+00 : f32
    %13 = vector.broadcast %cst_7 : f32 to vector<16x128xf32>
    %14 = arith.maximumf %12, %13 : vector<16x128xf32>
    %15 = math.absf %12 : vector<16x128xf32>
    %cst_8 = arith.constant 0.000000e+00 : f32
    %16 = vector.broadcast %cst_8 : f32 to vector<16x128xf32>
    %17 = arith.subf %16, %15 : vector<16x128xf32>
    %18 = math.exp %17 : vector<16x128xf32>
    %19 = math.log1p %18 : vector<16x128xf32>
    %20 = arith.addf %14, %19 : vector<16x128xf32>
    %cst_9 = arith.constant dense<0.000000e+00> : vector<16x128xf32>
    %21 = tpu.matmul %20, %2, %cst_9 {dimension_numbers = #tpu.dot_dimension_numbers<[1], [0], [0], [1], [0, 0, 1, 1], [], []>} : vector<16x128xf32>, vector<128x128xf32>, vector<16x128xf32> -> vector<16x128xf32>
    %22 = vector.broadcast %7 : vector<1x128xf32> to vector<16x128xf32>
    %23 = arith.addf %21, %22 : vector<16x128xf32>
    %cst_10 = arith.constant 0.000000e+00 : f32
    %24 = vector.broadcast %cst_10 : f32 to vector<16x128xf32>
    %25 = arith.maximumf %23, %24 : vector<16x128xf32>
    %26 = math.absf %23 : vector<16x128xf32>
    %cst_11 = arith.constant 0.000000e+00 : f32
    %27 = vector.broadcast %cst_11 : f32 to vector<16x128xf32>
    %28 = arith.subf %27, %26 : vector<16x128xf32>
    %29 = math.exp %28 : vector<16x128xf32>
    %30 = math.log1p %29 : vector<16x128xf32>
    %31 = arith.addf %25, %30 : vector<16x128xf32>
    %cst_12 = arith.constant dense<0.000000e+00> : vector<16x128xf32>
    %32 = tpu.matmul %31, %3, %cst_12 {dimension_numbers = #tpu.dot_dimension_numbers<[1], [0], [0], [1], [0, 0, 1, 1], [], []>} : vector<16x128xf32>, vector<128x128xf32>, vector<16x128xf32> -> vector<16x128xf32>
    %33 = vector.broadcast %8 : vector<1x128xf32> to vector<16x128xf32>
    %34 = arith.addf %32, %33 : vector<16x128xf32>
    %cst_13 = arith.constant 0.000000e+00 : f32
    %35 = vector.broadcast %cst_13 : f32 to vector<16x128xf32>
    %36 = arith.maximumf %34, %35 : vector<16x128xf32>
    %37 = math.absf %34 : vector<16x128xf32>
    %cst_14 = arith.constant 0.000000e+00 : f32
    %38 = vector.broadcast %cst_14 : f32 to vector<16x128xf32>
    %39 = arith.subf %38, %37 : vector<16x128xf32>
    %40 = math.exp %39 : vector<16x128xf32>
    %41 = math.log1p %40 : vector<16x128xf32>
    %42 = arith.addf %36, %41 : vector<16x128xf32>
    %cst_15 = arith.constant dense<0.000000e+00> : vector<16x128xf32>
    %43 = tpu.matmul %42, %4, %cst_15 {dimension_numbers = #tpu.dot_dimension_numbers<[1], [0], [0], [1], [0, 0, 1, 1], [], []>} : vector<16x128xf32>, vector<128x128xf32>, vector<16x128xf32> -> vector<16x128xf32>
    %44 = vector.broadcast %9 : vector<1x128xf32> to vector<16x128xf32>
    %45 = arith.addf %43, %44 : vector<16x128xf32>
    %46 = math.tanh %45 : vector<16x128xf32>
    %c0_16 = arith.constant 0 : index
    %c0_17 = arith.constant 0 : index
    %47 = vector.load %arg2[%c0_16, %c0_17] : memref<16x128xf32, #tpu.memory_space<vmem>>, vector<16x128xf32>
    tpu.vector_store %arg2[%c0_16, %c0_17], %46 {strides = array<i32>} : memref<16x128xf32, #tpu.memory_space<vmem>>, vector<16x128xf32>,
    return
  }
}

</mosaic_0001>

<llo_original>
// kernel: tpu_custom_call.1
$region0: #{tpu_custom_call.1}
  #allocation0 [shape = 'u32[]', space=smem, size = 0x4, offset = 0x4, fixed_abs, tag = 'smem constant byte address 0x4 - core index']
  #allocation1 [shape = 'u32[144,128]{1,0:T(1,128)}', space=vmem, size = 0x12000, scoped, tag = 'internal scratch']
  %s0 = inlined_call_operand.hbm [shape: f32[16,32], index: 0, kind: input, shape index: {}]
  %s1 = inlined_call_operand.hbm [shape: f32[424,128], index: 1, kind: input, shape index: {}]
  %s2 = inlined_call_operand.hbm [shape: f32[16,128], index: 2, kind: output, shape index: {}]
  %s3 = sld [smem:[#allocation0]]
  $region26: #{tpu_custom_call.1} parent=0
    _
  %s5 = ssub.s32 1, %s3
  %s6 = scalar_select 0, %s5, %s3
  $region1: #{tpu_custom_call.1} parent=0
    #allocation2 [shape = 'u8[8192]{0}', space=vmem, size = 0x2000, scoped, tag = 'input window, operand 0, single buffered']
    #allocation3 [shape = 's32[1]{0}', space=sflag, size = 0x4, scoped, tag = 'scoped memory for tpu_custom_call.1']
    #allocation4 [shape = 's32[1]{0}', space=sflag, size = 0x4, scoped, tag = 'scoped memory for tpu_custom_call.1']
    #allocation5 [shape = 'u8[217088]{0}', space=vmem, size = 0x35000, scoped, tag = 'input window, operand 1, single buffered']
    #allocation6 [shape = 's32[1]{0}', space=sflag, size = 0x4, scoped, tag = 'scoped memory for tpu_custom_call.1']
    #allocation7 [shape = 'u8[8192]{0}', space=vmem, size = 0x2000, scoped, tag = 'output window, operand 0, single buffered']
    %7 = vsyncpa [#allocation3], 0
    %8 = vsyncpa [#allocation6], 0
    %9 = vsyncpa [#allocation4], 0
    // Predicated region
    $region2: #{tpu_custom_call.1} parent=1 // pred_check
      _
    $region3: #{tpu_custom_call.1} parent=1 // pred_check_branch
      %11 = sbr.rel (0) target = $region5
    $region4: #{tpu_custom_call.1} parent=1 // pred_region
      %s13 = ssub.s32 256, 256
      %14 = vsyncadd [#allocation3], %s13
      %s15 = sshll.u32 [#allocation2], 4
      %s16 = int_to_ptr.vmem [resolvable:$true] %s15
      %21 = dma.hbm_to_vmem [thread:$0]  %s0, 256, %s16, [#allocation3], 128, 128, 8
    $region5: #{tpu_custom_call.1} parent=1 // pred_fallthru
      _
    // Predicated region
    $region6: #{tpu_custom_call.1} parent=1 // pred_check
      _
    $region7: #{tpu_custom_call.1} parent=1 // pred_check_branch
      %23 = sbr.rel (0) target = $region9
    $region8: #{tpu_custom_call.1} parent=1 // pred_region
      %s25 = ssub.s32 6784, 6784
      %26 = vsyncadd [#allocation6], %s25
      %s27 = sshll.u32 [#allocation5], 4
      %s28 = int_to_ptr.vmem [resolvable:$true] %s27
      %33 = dma.hbm_to_vmem [thread:$0]  %s1, 6784, %s28, [#allocation6], 128, 128, 8
    $region9: #{tpu_custom_call.1} parent=1 // pred_fallthru
      _
    // Predicated region
    $region10: #{tpu_custom_call.1} parent=1 // pred_check
      _
    $region11: #{tpu_custom_call.1} parent=1 // pred_check_branch
      %35 = sbr.rel (0) target = $region13
    $region12: #{tpu_custom_call.1} parent=1 // pred_region
      %36 = dma.done [#allocation3], 256
    $region13: #{tpu_custom_call.1} parent=1 // pred_fallthru
      _
    // Predicated region
    $region14: #{tpu_custom_call.1} parent=1 // pred_check
      _
    $region15: #{tpu_custom_call.1} parent=1 // pred_check_branch
      %38 = sbr.rel (0) target = $region17
    $region16: #{tpu_custom_call.1} parent=1 // pred_region
      %39 = dma.done [#allocation6], 6784
    $region17: #{tpu_custom_call.1} parent=1 // pred_fallthru
      _
    %v40 = vld [vmem:[#allocation2] sm:$0xff]
    %v41 = vld [vmem:[#allocation2 + $0x8] sm:$0xff]
    %v42 = vld [vmem:[#allocation5] sm:$0xff]
    %v43 = vld [vmem:[#allocation5 + $0x8] sm:$0xff]
    %v44 = vld [vmem:[#allocation5 + $0x10] sm:$0xff]
    %v45 = vld [vmem:[#allocation5 + $0x18] sm:$0xff]
    %v46 = vld [vmem:[#allocation5 + $0x20] sm:$0xff]
    %v47 = vld [vmem:[#allocation5 + $0x28] sm:$0xff]
    %v48 = vld [vmem:[#allocation5 + $0x30] sm:$0xff]
    %v49 = vld [vmem:[#allocation5 + $0x38] sm:$0xff]
    %v50 = vld [vmem:[#allocation5 + $0x40] sm:$0xff]
    %v51 = vld [vmem:[#allocation5 + $0x48] sm:$0xff]
    %v52 = vld [vmem:[#allocation5 + $0x50] sm:$0xff]
    %v53 = vld [vmem:[#allocation5 + $0x58] sm:$0xff]
    %v54 = vld [vmem:[#allocation5 + $0x60] sm:$0xff]
    %v55 = vld [vmem:[#allocation5 + $0x68] sm:$0xff]
    %v56 = vld [vmem:[#allocation5 + $0x70] sm:$0xff]
    %v57 = vld [vmem:[#allocation5 + $0x78] sm:$0xff]
    %v58 = vld [vmem:[#allocation5 + $0x80] sm:$0xff]
    %v59 = vld [vmem:[#allocation5 + $0x88] sm:$0xff]
    %v60 = vld [vmem:[#allocation5 + $0x90] sm:$0xff]
    %v61 = vld [vmem:[#allocation5 + $0x98] sm:$0xff]
    %v62 = vld [vmem:[#allocation5 + $0xa0] sm:$0xff]
    %v63 = vld [vmem:[#allocation5 + $0xa8] sm:$0xff]
    %v64 = vld [vmem:[#allocation5 + $0xb0] sm:$0xff]
    %v65 = vld [vmem:[#allocation5 + $0xb8] sm:$0xff]
    %v66 = vld [vmem:[#allocation5 + $0xc0] sm:$0xff]
    %v67 = vld [vmem:[#allocation5 + $0xc8] sm:$0xff]
    %v68 = vld [vmem:[#allocation5 + $0xd0] sm:$0xff]
    %v69 = vld [vmem:[#allocation5 + $0xd8] sm:$0xff]
    %v70 = vld [vmem:[#allocation5 + $0xe0] sm:$0xff]
    %v71 = vld [vmem:[#allocation5 + $0xe8] sm:$0xff]
    %v72 = vld [vmem:[#allocation5 + $0xf0] sm:$0xff]
    %v73 = vld [vmem:[#allocation5 + $0xf8] sm:$0xff]
    %v74 = vld [vmem:[#allocation5 + $0x100] sm:$0xff]
    %v75 = vld [vmem:[#allocation5 + $0x108] sm:$0xff]
    %v76 = vld [vmem:[#allocation5 + $0x110] sm:$0xff]
    %v77 = vld [vmem:[#allocation5 + $0x118] sm:$0xff]
    %v78 = vld [vmem:[#allocation5 + $0x120] sm:$0xff]
    %v79 = vld [vmem:[#allocation5 + $0x128] sm:$0xff]
    %v80 = vld [vmem:[#allocation5 + $0x130] sm:$0xff]
    %v81 = vld [vmem:[#allocation5 + $0x138] sm:$0xff]
    %v82 = vld [vmem:[#allocation5 + $0x140] sm:$0xff]
    %v83 = vld [vmem:[#allocation5 + $0x148] sm:$0xff]
    %v84 = vld [vmem:[#allocation5 + $0x150] sm:$0xff]
    %v85 = vld [vmem:[#allocation5 + $0x158] sm:$0xff]
    %v86 = vld [vmem:[#allocation5 + $0x160] sm:$0xff]
    %v87 = vld [vmem:[#allocation5 + $0x168] sm:$0xff]
    %v88 = vld [vmem:[#allocation5 + $0x170] sm:$0xff]
    %v89 = vld [vmem:[#allocation5 + $0x178] sm:$0xff]
    %v90 = vld [vmem:[#allocation5 + $0x180] sm:$0xff]
    %v91 = vld [vmem:[#allocation5 + $0x188] sm:$0xff]
    %v92 = vld [vmem:[#allocation5 + $0x190] sm:$0xff]
    %v93 = vld [vmem:[#allocation5 + $0x198] sm:$0xff]
    %v94 = vld [vmem:[#allocation5 + $0x1a0] sm:$0xff]
    %v95 = vlaneseq
    %v96 = vshrl.u32 %v95, 7
    %v97 = vsub.s32 0, %v96
    %v98 = vrot.slane %v94, %v97
    %vm99 = vcmask 261120
    %v101 = vsel %vm99, %v40, 0
    %v104 = vsel %vm99, %v41, 0
    %106 = vmatprep.subr.mxu0 0.0
    %107 = vmatpush1.msra.mxu0 %v42
    %108 = vmatprep.subr.mxu0 0.0
    %109 = vmatpush1.msra.mxu0 %v43
    %110 = vmatprep.subr.mxu0 0.0
    %111 = vmatpush1.msra.mxu0 %v44
    %112 = vmatprep.subr.mxu0 0.0
    %113 = vmatpush1.msra.mxu0 %v45
    %114 = vmatprep.subr.mxu0 0.0
    %115 = vmatpush1.msra.mxu0 0.0
    %116 = vmatprep.subr.mxu0 0.0
    %117 = vmatpush1.msra.mxu0 0.0
    %118 = vmatprep.subr.mxu0 0.0
    %119 = vmatpush1.msra.mxu0 0.0
    %120 = vmatprep.subr.mxu0 0.0
    %121 = vmatpush1.msra.mxu0 0.0
    %122 = vmatprep.subr.mxu0 0.0
    %123 = vmatpush1.msra.mxu0 0.0
    %124 = vmatprep.subr.mxu0 0.0
    %125 = vmatpush1.msra.mxu0 0.0
    %126 = vmatprep.subr.mxu0 0.0
    %127 = vmatpush1.msra.mxu0 0.0
    %128 = vmatprep.subr.mxu0 0.0
    %129 = vmatpush1.msra.mxu0 0.0
    %130 = vmatprep.subr.mxu0 0.0
    %131 = vmatpush1.msra.mxu0 0.0
    %132 = vmatprep.subr.mxu0 0.0
    %133 = vmatpush1.msra.mxu0 0.0
    %134 = vmatprep.subr.mxu0 0.0
    %135 = vmatpush1.msra.mxu0 0.0
    %136 = vmatprep.subr.mxu0 0.0
    %137 = vmatpush1.msra.mxu0 0.0
    %138 = vmatprep.subr.mxu0 0.0
    %139 = vmatpush1.msra.mxu0 0.0
    %140 = vmatprep.subr.mxu0 0.0
    %141 = vmatpush1.msra.mxu0 0.0
    %142 = vmatprep.subr.mxu0 0.0
    %143 = vmatpush1.msra.mxu0 0.0
    %144 = vmatprep.subr.mxu0 0.0
    %145 = vmatpush1.msra.mxu0 0.0
    %146 = vmatprep.subr.mxu0 0.0
    %147 = vmatpush1.msra.mxu0 0.0
    %148 = vmatprep.subr.mxu0 0.0
    %149 = vmatpush1.msra.mxu0 0.0
    %150 = vmatprep.subr.mxu0 0.0
    %151 = vmatpush1.msra.mxu0 0.0
    %152 = vmatprep.subr.mxu0 0.0
    %153 = vmatpush1.msra.mxu0 0.0
    %154 = vmatprep.subr.mxu0 0.0
    %155 = vmatpush1.msra.mxu0 0.0
    %156 = vmatprep.subr.mxu0 0.0
    %157 = vmatpush1.msra.mxu0 0.0
    %158 = vmatprep.subr.mxu0 0.0
    %159 = vmatpush1.msra.mxu0 0.0
    %160 = vmatprep.subr.mxu0 0.0
    %161 = vmatpush1.msra.mxu0 0.0
    %162 = vmatprep.subr.mxu0 0.0
    %163 = vmatpush1.msra.mxu0 0.0
    %164 = vmatprep.subr.mxu0 0.0
    %165 = vmatpush1.msra.mxu0 0.0
    %166 = vmatprep.subr.mxu0 0.0
    %167 = vmatpush1.msra.mxu0 0.0
    %168 = vmatprep.subr.mxu0 0.0
    %169 = vmatpush1.msra.mxu0 0.0
    %170 = vmatprep.mubr.f32.mxu0 0.0
    %171 = vmatmul.mubr.f32.gmra.mrb[0].mxu0 %v101
    %v172 = vpop.f32.mrb[0].mxu0
    %v173 = vadd.f32 %v98, %v172
    %v174 = vpop.f32.mrb[0].mxu0
    %175 = vmatprep.mubr.f32.mxu0 0.0
    %176 = vmatmul.mubr.f32.gmra.mrb[0].mxu0 %v104
    %v177 = vpop.f32.mrb[0].mxu0
    %v178 = vadd.f32 %v98, %v177
    %v179 = vpop.f32.mrb[0].mxu0
    %180 = vdwg.mxu0
    %v181 = vmax.f32 %v173, 0.0
    %v182 = vmax.f32 %v178, 0.0
    %v183 = vand.u32 2147483647, %v173
    %v184 = vand.u32 2147483647, %v178
    %v185 = vsub.f32 0.0, %v183
    %v186 = vsub.f32 0.0, %v184
    %v187 = vmul.f32 %v185, 1.442695
    %v188 = vpow.pop %v187
    %v189 = vmul.f32 %v186, 1.442695
    %v190 = vpow.pop %v189
    %v191 = vadd.f32 %v188, 1.0
    %v192 = vlog2.pop %v191
    %v193 = vmul.f32 %v192, 0.6931472
    %v194 = vmul.f32 -0.5, %v188
    %v195 = vadd.f32 %v194, 1.0
    %v196 = vmul.f32 %v195, %v188
    %v197 = vand.u32 2147483647, %v188
    %vm198 = vcmp.lt.f32.partialorder %v197, 0.0004427343
    %v199 = vsel %vm198, %v196, %v193
    %v200 = vadd.f32 %v190, 1.0
    %v201 = vlog2.pop %v200
    %v202 = vmul.f32 %v201, 0.6931472
    %v203 = vmul.f32 -0.5, %v190
    %v204 = vadd.f32 %v203, 1.0
    %v205 = vmul.f32 %v204, %v190
    %v206 = vand.u32 2147483647, %v190
    %vm207 = vcmp.lt.f32.partialorder %v206, 0.0004427343
    %v208 = vsel %vm207, %v205, %v202
    %v209 = vadd.f32 %v181, %v199
    %v210 = vadd.f32 %v182, %v208
    %v211 = vlaneseq
    %v212 = vshrl.u32 %v211, 7
    %v213 = vsub.s32 1, %v212
    %v214 = vrot.slane %v94, %v213
    %215 = vmatprep.subr.mxu0 0.0
    %216 = vmatpush1.msra.mxu0 %v46
    %217 = vmatprep.subr.mxu0 0.0
    %218 = vmatpush1.msra.mxu0 %v47
    %219 = vmatprep.subr.mxu0 0.0
    %220 = vmatpush1.msra.mxu0 %v48
    %221 = vmatprep.subr.mxu0 0.0
    %222 = vmatpush1.msra.mxu0 %v49
    %223 = vmatprep.subr.mxu0 0.0
    %224 = vmatpush1.msra.mxu0 %v50
    %225 = vmatprep.subr.mxu0 0.0
    %226 = vmatpush1.msra.mxu0 %v51
    %227 = vmatprep.subr.mxu0 0.0
    %228 = vmatpush1.msra.mxu0 %v52
    %229 = vmatprep.subr.mxu0 0.0
    %230 = vmatpush1.msra.mxu0 %v53
    %231 = vmatprep.subr.mxu0 0.0
    %232 = vmatpush1.msra.mxu0 %v54
    %233 = vmatprep.subr.mxu0 0.0
    %234 = vmatpush1.msra.mxu0 %v55
    %235 = vmatprep.subr.mxu0 0.0
    %236 = vmatpush1.msra.mxu0 %v56
    %237 = vmatprep.subr.mxu0 0.0
    %238 = vmatpush1.msra.mxu0 %v57
    %239 = vmatprep.subr.mxu0 0.0
    %240 = vmatpush1.msra.mxu0 %v58
    %241 = vmatprep.subr.mxu0 0.0
    %242 = vmatpush1.msra.mxu0 %v59
    %243 = vmatprep.subr.mxu0 0.0
    %244 = vmatpush1.msra.mxu0 %v60
    %245 = vmatprep.subr.mxu0 0.0
    %246 = vmatpush1.msra.mxu0 %v61
    %247 = vmatprep.subr.mxu0 0.0
    %248 = vmatpush1.msra.mxu0 0.0
    %249 = vmatprep.subr.mxu0 0.0
    %250 = vmatpush1.msra.mxu0 0.0
    %251 = vmatprep.subr.mxu0 0.0
    %252 = vmatpush1.msra.mxu0 0.0
    %253 = vmatprep.subr.mxu0 0.0
    %254 = vmatpush1.msra.mxu0 0.0
    %255 = vmatprep.subr.mxu0 0.0
    %256 = vmatpush1.msra.mxu0 0.0
    %257 = vmatprep.subr.mxu0 0.0
    %258 = vmatpush1.msra.mxu0 0.0
    %259 = vmatprep.subr.mxu0 0.0
    %260 = vmatpush1.msra.mxu0 0.0
    %261 = vmatprep.subr.mxu0 0.0
    %262 = vmatpush1.msra.mxu0 0.0
    %263 = vmatprep.subr.mxu0 0.0
    %264 = vmatpush1.msra.mxu0 0.0
    %265 = vmatprep.subr.mxu0 0.0
    %266 = vmatpush1.msra.mxu0 0.0
    %267 = vmatprep.subr.mxu0 0.0
    %268 = vmatpush1.msra.mxu0 0.0
    %269 = vmatprep.subr.mxu0 0.0
    %270 = vmatpush1.msra.mxu0 0.0
    %271 = vmatprep.subr.mxu0 0.0
    %272 = vmatpush1.msra.mxu0 0.0
    %273 = vmatprep.subr.mxu0 0.0
    %274 = vmatpush1.msra.mxu0 0.0
    %275 = vmatprep.subr.mxu0 0.0
    %276 = vmatpush1.msra.mxu0 0.0
    %277 = vmatprep.subr.mxu0 0.0
    %278 = vmatpush1.msra.mxu0 0.0
    %279 = vmatprep.mubr.f32.mxu0 0.0
    %280 = vmatmul.mubr.f32.gmra.mrb[0].mxu0 %v209
    %v281 = vpop.f32.mrb[0].mxu0
    %v282 = vadd.f32 %v214, %v281
    %v283 = vpop.f32.mrb[0].mxu0
    %284 = vmatprep.mubr.f32.mxu0 0.0
    %285 = vmatmul.mubr.f32.gmra.mrb[0].mxu0 %v210
    %v286 = vpop.f32.mrb[0].mxu0
    %v287 = vadd.f32 %v214, %v286
    %v288 = vpop.f32.mrb[0].mxu0
    %289 = vdwg.mxu0
    %v290 = vmax.f32 %v282, 0.0
    %v291 = vmax.f32 %v287, 0.0
    %v292 = vand.u32 2147483647, %v282
    %v293 = vand.u32 2147483647, %v287
    %v294 = vsub.f32 0.0, %v292
    %v295 = vsub.f32 0.0, %v293
    %v296 = vmul.f32 %v294, 1.442695
    %v297 = vpow.pop %v296
    %v298 = vmul.f32 %v295, 1.442695
    %v299 = vpow.pop %v298
    %v300 = vadd.f32 %v297, 1.0
    %v301 = vlog2.pop %v300
    %v302 = vmul.f32 %v301, 0.6931472
    %v303 = vmul.f32 -0.5, %v297
    %v304 = vadd.f32 %v303, 1.0
    %v305 = vmul.f32 %v304, %v297
    %v306 = vand.u32 2147483647, %v297
    %vm307 = vcmp.lt.f32.partialorder %v306, 0.0004427343
    %v308 = vsel %vm307, %v305, %v302
    %v309 = vadd.f32 %v299, 1.0
    %v310 = vlog2.pop %v309
    %v311 = vmul.f32 %v310, 0.6931472
    %v312 = vmul.f32 -0.5, %v299
    %v313 = vadd.f32 %v312, 1.0
    %v314 = vmul.f32 %v313, %v299
    %v315 = vand.u32 2147483647, %v299
    %vm316 = vcmp.lt.f32.partialorder %v315, 0.0004427343
    %v317 = vsel %vm316, %v314, %v311
    %v318 = vadd.f32 %v290, %v308
    %v319 = vadd.f32 %v291, %v317
    %v320 = vlaneseq
    %v321 = vshrl.u32 %v320, 7
    %v322 = vsub.s32 2, %v321
    %v323 = vrot.slane %v94, %v322
    %324 = vmatprep.subr.mxu0 0.0
    %325 = vmatpush1.msra.mxu0 %v62
    %326 = vmatprep.subr.mxu0 0.0
    %327 = vmatpush1.msra.mxu0 %v63
    %328 = vmatprep.subr.mxu0 0.0
    %329 = vmatpush1.msra.mxu0 %v64
    %330 = vmatprep.subr.mxu0 0.0
    %331 = vmatpush1.msra.mxu0 %v65
    %332 = vmatprep.subr.mxu0 0.0
    %333 = vmatpush1.msra.mxu0 %v66
    %334 = vmatprep.subr.mxu0 0.0
    %335 = vmatpush1.msra.mxu0 %v67
    %336 = vmatprep.subr.mxu0 0.0
    %337 = vmatpush1.msra.mxu0 %v68
    %338 = vmatprep.subr.mxu0 0.0
    %339 = vmatpush1.msra.mxu0 %v69
    %340 = vmatprep.subr.mxu0 0.0
    %341 = vmatpush1.msra.mxu0 %v70
    %342 = vmatprep.subr.mxu0 0.0
    %343 = vmatpush1.msra.mxu0 %v71
    %344 = vmatprep.subr.mxu0 0.0
    %345 = vmatpush1.msra.mxu0 %v72
    %346 = vmatprep.subr.mxu0 0.0
    %347 = vmatpush1.msra.mxu0 %v73
    %348 = vmatprep.subr.mxu0 0.0
    %349 = vmatpush1.msra.mxu0 %v74
    %350 = vmatprep.subr.mxu0 0.0
    %351 = vmatpush1.msra.mxu0 %v75
    %352 = vmatprep.subr.mxu0 0.0
    %353 = vmatpush1.msra.mxu0 %v76
    %354 = vmatprep.subr.mxu0 0.0
    %355 = vmatpush1.msra.mxu0 %v77
    %356 = vmatprep.subr.mxu0 0.0
    %357 = vmatpush1.msra.mxu0 0.0
    %358 = vmatprep.subr.mxu0 0.0
    %359 = vmatpush1.msra.mxu0 0.0
    %360 = vmatprep.subr.mxu0 0.0
    %361 = vmatpush1.msra.mxu0 0.0
    %362 = vmatprep.subr.mxu0 0.0
    %363 = vmatpush1.msra.mxu0 0.0
    %364 = vmatprep.subr.mxu0 0.0
    %365 = vmatpush1.msra.mxu0 0.0
    %366 = vmatprep.subr.mxu0 0.0
    %367 = vmatpush1.msra.mxu0 0.0
    %368 = vmatprep.subr.mxu0 0.0
    %369 = vmatpush1.msra.mxu0 0.0
    %370 = vmatprep.subr.mxu0 0.0
    %371 = vmatpush1.msra.mxu0 0.0
    %372 = vmatprep.subr.mxu0 0.0
    %373 = vmatpush1.msra.mxu0 0.0
    %374 = vmatprep.subr.mxu0 0.0
    %375 = vmatpush1.msra.mxu0 0.0
    %376 = vmatprep.subr.mxu0 0.0
    %377 = vmatpush1.msra.mxu0 0.0
    %378 = vmatprep.subr.mxu0 0.0
    %379 = vmatpush1.msra.mxu0 0.0
    %380 = vmatprep.subr.mxu0 0.0
    %381 = vmatpush1.msra.mxu0 0.0
    %382 = vmatprep.subr.mxu0 0.0
    %383 = vmatpush1.msra.mxu0 0.0
    %384 = vmatprep.subr.mxu0 0.0
    %385 = vmatpush1.msra.mxu0 0.0
    %386 = vmatprep.subr.mxu0 0.0
    %387 = vmatpush1.msra.mxu0 0.0
    %388 = vmatprep.mubr.f32.mxu0 0.0
    %389 = vmatmul.mubr.f32.gmra.mrb[0].mxu0 %v318
    %v390 = vpop.f32.mrb[0].mxu0
    %v391 = vadd.f32 %v323, %v390
    %v392 = vpop.f32.mrb[0].mxu0
    %393 = vmatprep.mubr.f32.mxu0 0.0
    %394 = vmatmul.mubr.f32.gmra.mrb[0].mxu0 %v319
    %v395 = vpop.f32.mrb[0].mxu0
    %v396 = vadd.f32 %v323, %v395
    %v397 = vpop.f32.mrb[0].mxu0
    %398 = vdwg.mxu0
    %v399 = vmax.f32 %v391, 0.0
    %v400 = vmax.f32 %v396, 0.0
    %v401 = vand.u32 2147483647, %v391
    %v402 = vand.u32 2147483647, %v396
    %v403 = vsub.f32 0.0, %v401
    %v404 = vsub.f32 0.0, %v402
    %v405 = vmul.f32 %v403, 1.442695
    %v406 = vpow.pop %v405
    %v407 = vmul.f32 %v404, 1.442695
    %v408 = vpow.pop %v407
    %v409 = vadd.f32 %v406, 1.0
    %v410 = vlog2.pop %v409
    %v411 = vmul.f32 %v410, 0.6931472
    %v412 = vmul.f32 -0.5, %v406
    %v413 = vadd.f32 %v412, 1.0
    %v414 = vmul.f32 %v413, %v406
    %v415 = vand.u32 2147483647, %v406
    %vm416 = vcmp.lt.f32.partialorder %v415, 0.0004427343
    %v417 = vsel %vm416, %v414, %v411
    %v418 = vadd.f32 %v408, 1.0
    %v419 = vlog2.pop %v418
    %v420 = vmul.f32 %v419, 0.6931472
    %v421 = vmul.f32 -0.5, %v408
    %v422 = vadd.f32 %v421, 1.0
    %v423 = vmul.f32 %v422, %v408
    %v424 = vand.u32 2147483647, %v408
    %vm425 = vcmp.lt.f32.partialorder %v424, 0.0004427343
    %v426 = vsel %vm425, %v423, %v420
    %v427 = vadd.f32 %v399, %v417
    %v428 = vadd.f32 %v400, %v426
    %v429 = vlaneseq
    %v430 = vshrl.u32 %v429, 7
    %v431 = vsub.s32 3, %v430
    %v432 = vrot.slane %v94, %v431
    %433 = vmatprep.subr.mxu0 0.0
    %434 = vmatpush1.msra.mxu0 %v78
    %435 = vmatprep.subr.mxu0 0.0
    %436 = vmatpush1.msra.mxu0 %v79
    %437 = vmatprep.subr.mxu0 0.0
    %438 = vmatpush1.msra.mxu0 %v80
    %439 = vmatprep.subr.mxu0 0.0
    %440 = vmatpush1.msra.mxu0 %v81
    %441 = vmatprep.subr.mxu0 0.0
    %442 = vmatpush1.msra.mxu0 %v82
    %443 = vmatprep.subr.mxu0 0.0
    %444 = vmatpush1.msra.mxu0 %v83
    %445 = vmatprep.subr.mxu0 0.0
    %446 = vmatpush1.msra.mxu0 %v84
    %447 = vmatprep.subr.mxu0 0.0
    %448 = vmatpush1.msra.mxu0 %v85
    %449 = vmatprep.subr.mxu0 0.0
    %450 = vmatpush1.msra.mxu0 %v86
    %451 = vmatprep.subr.mxu0 0.0
    %452 = vmatpush1.msra.mxu0 %v87
    %453 = vmatprep.subr.mxu0 0.0
    %454 = vmatpush1.msra.mxu0 %v88
    %455 = vmatprep.subr.mxu0 0.0
    %456 = vmatpush1.msra.mxu0 %v89
    %457 = vmatprep.subr.mxu0 0.0
    %458 = vmatpush1.msra.mxu0 %v90
    %459 = vmatprep.subr.mxu0 0.0
    %460 = vmatpush1.msra.mxu0 %v91
    %461 = vmatprep.subr.mxu0 0.0
    %462 = vmatpush1.msra.mxu0 %v92
    %463 = vmatprep.subr.mxu0 0.0
    %464 = vmatpush1.msra.mxu0 %v93
    %465 = vmatprep.subr.mxu0 0.0
    %466 = vmatpush1.msra.mxu0 0.0
    %467 = vmatprep.subr.mxu0 0.0
    %468 = vmatpush1.msra.mxu0 0.0
    %469 = vmatprep.subr.mxu0 0.0
    %470 = vmatpush1.msra.mxu0 0.0
    %471 = vmatprep.subr.mxu0 0.0
    %472 = vmatpush1.msra.mxu0 0.0
    %473 = vmatprep.subr.mxu0 0.0
    %474 = vmatpush1.msra.mxu0 0.0
    %475 = vmatprep.subr.mxu0 0.0
    %476 = vmatpush1.msra.mxu0 0.0
    %477 = vmatprep.subr.mxu0 0.0
    %478 = vmatpush1.msra.mxu0 0.0
    %479 = vmatprep.subr.mxu0 0.0
    %480 = vmatpush1.msra.mxu0 0.0
    %481 = vmatprep.subr.mxu0 0.0
    %482 = vmatpush1.msra.mxu0 0.0
    %483 = vmatprep.subr.mxu0 0.0
    %484 = vmatpush1.msra.mxu0 0.0
    %485 = vmatprep.subr.mxu0 0.0
    %486 = vmatpush1.msra.mxu0 0.0
    %487 = vmatprep.subr.mxu0 0.0
    %488 = vmatpush1.msra.mxu0 0.0
    %489 = vmatprep.subr.mxu0 0.0
    %490 = vmatpush1.msra.mxu0 0.0
    %491 = vmatprep.subr.mxu0 0.0
    %492 = vmatpush1.msra.mxu0 0.0
    %493 = vmatprep.subr.mxu0 0.0
    %494 = vmatpush1.msra.mxu0 0.0
    %495 = vmatprep.subr.mxu0 0.0
    %496 = vmatpush1.msra.mxu0 0.0
    %497 = vmatprep.mubr.f32.mxu0 0.0
    %498 = vmatmul.mubr.f32.gmra.mrb[0].mxu0 %v427
    %v499 = vpop.f32.mrb[0].mxu0
    %v500 = vadd.f32 %v432, %v499
    %v501 = vpop.f32.mrb[0].mxu0
    %502 = vmatprep.mubr.f32.mxu0 0.0
    %503 = vmatmul.mubr.f32.gmra.mrb[0].mxu0 %v428
    %v504 = vpop.f32.mrb[0].mxu0
    %v505 = vadd.f32 %v432, %v504
    %v506 = vpop.f32.mrb[0].mxu0
    %507 = vdwg.mxu0
    %v508 = vtanh.pop %v500
    %v509 = vtanh.pop %v505
    %510 = vst [vmem:[#allocation7] sm:$0xff] %v508
    %511 = vst [vmem:[#allocation7 + $0x8] sm:$0xff] %v509
    // Predicated region
    $region18: #{tpu_custom_call.1} parent=1 // pred_check
      _
    $region19: #{tpu_custom_call.1} parent=1 // pred_check_branch
      %513 = sbr.rel (0) target = $region21
    $region20: #{tpu_custom_call.1} parent=1 // pred_region
      %s515 = ssub.s32 256, 256
      %516 = vsyncadd [#allocation4], %s515
      %s517 = sshll.u32 [#allocation7], 4
      %s518 = int_to_ptr.vmem [resolvable:$true] %s517
      %523 = dma.vmem_to_hbm [thread:$0]  %s518, 256, %s2, [#allocation4], 128, 128, 8
    $region21: #{tpu_custom_call.1} parent=1 // pred_fallthru
      _
    // Predicated region
    $region22: #{tpu_custom_call.1} parent=1 // pred_check
      _
    $region23: #{tpu_custom_call.1} parent=1 // pred_check_branch
      %525 = sbr.rel (0) target = $region25
    $region24: #{tpu_custom_call.1} parent=1 // pred_region
      %526 = dma.done [#allocation4], 256
    $region25: #{tpu_custom_call.1} parent=1 // pred_fallthru
      _
    %527 = vsyncpa [#allocation3], 1
    %528 = vsyncpa [#allocation6], 1
    %529 = vsyncpa [#allocation4], 1

</llo_original>
